<compile_context>
chip_gen: v5e
topology: v5e:2x2
jax: 0.10.0
libtpu: 0.0.40
codegen_flags: <defaults>
</compile_context>

<pallas_src>
import functools

import jax
import jax.numpy as jnp
from jax.experimental import pallas as pl
from jax.experimental.pallas import tpu as pltpu

LANE = 128  # TPU lane width; node / feature / hidden dims padded to multiples


# ----------------------------- Pallas kernel -----------------------------

def _gcn_views_kernel(adj_idx_ref, x_idx_ref,            # scalar prefetch (SMEM)
                      a_ref, x_ref, w1_ref, b1_ref, w2_ref, b2_ref, p_ref,
                      z_ref, g_ref):
    """One grid step = one view: fused 2-layer GCN + sum-pool readout."""
    del adj_idx_ref, x_idx_ref            # only used by the index maps
    a = a_ref[0]                          # [Np, Np] bf16  (reused for both layers)
    x = x_ref[0]                          # [Np, Fp] bf16

    # layer 1:  h1 = relu( Â @ (X @ W1) + b1 )   (f32 accumulation on the MXU)
    xw1 = jnp.dot(x, w1_ref[...], preferred_element_type=jnp.float32)
    h1 = jnp.dot(a, xw1.astype(jnp.bfloat16), preferred_element_type=jnp.float32)
    h1 = jnp.maximum(h1 + b1_ref[...], 0.0)

    # layer 2:  z = Â @ (h1 @ W2) + b2
    hw2 = jnp.dot(h1.astype(jnp.bfloat16), w2_ref[...],
                  preferred_element_type=jnp.float32)
    z = jnp.dot(a, hw2.astype(jnp.bfloat16),
                preferred_element_type=jnp.float32) + b2_ref[...]
    z_ref[0] = z                          # [Np, Hp] f32, lane-dense store

    # readout:  g = P @ z  (per-graph sum pooling; P is a 0/1 bf16 matrix)
    g_ref[0] = jnp.dot(p_ref[...], z.astype(jnp.bfloat16),
                       preferred_element_type=jnp.float32)


def gcn_encode_views(adj_idx, x_idx, adj_stack, x_stack, w1, b1, w2, b2, pool):
    """Single fused pallas_call over all views (grid axis = view, parallel)."""
    n_views = adj_idx.shape[0]
    _, n, f = x_stack.shape
    hp = w2.shape[1]
    g = pool.shape[0]

    grid_spec = pltpu.PrefetchScalarGridSpec(
        num_scalar_prefetch=2,
        grid=(n_views,),
        in_specs=[
            # per-view adjacency / features selected via prefetched index vectors
            pl.BlockSpec((1, n, n), lambda v, ai, xi: (ai[v], 0, 0)),
            pl.BlockSpec((1, n, f), lambda v, ai, xi: (xi[v], 0, 0)),
            # parameters / pooling matrix: same block for every view (resident)
            pl.BlockSpec((f, hp),   lambda v, ai, xi: (0, 0)),
            pl.BlockSpec((1, hp),   lambda v, ai, xi: (0, 0)),
            pl.BlockSpec((hp, hp),  lambda v, ai, xi: (0, 0)),
            pl.BlockSpec((1, hp),   lambda v, ai, xi: (0, 0)),
            pl.BlockSpec((g, n),    lambda v, ai, xi: (0, 0)),
        ],
        out_specs=[
            pl.BlockSpec((1, n, hp), lambda v, ai, xi: (v, 0, 0)),
            pl.BlockSpec((1, g, hp), lambda v, ai, xi: (v, 0, 0)),
        ],
    )

    return pl.pallas_call(
        _gcn_views_kernel,
        out_shape=(
            jax.ShapeDtypeStruct((n_views, n, hp), jnp.float32),
            jax.ShapeDtypeStruct((n_views, g, hp), jnp.float32),
        ),
        grid_spec=grid_spec,
        compiler_params=pltpu.CompilerParams(
            dimension_semantics=("parallel",)),
    )(adj_idx, x_idx, adj_stack, x_stack, w1, b1, w2, b2, pool)


# ----------------------------- plain-JAX glue -----------------------------

def build_norm_adj(edge_index, edge_weight, num_nodes):
    """Dense D^{-1/2}(A + I)D^{-1/2} from COO edge_index / per-edge weights.

    Both directions of an (undirected) input edge get the same weight, so an
    edge-drop mask removes/keeps the edge symmetrically.
    """
    src, dst = edge_index[0], edge_index[1]
    a = jnp.zeros((num_nodes, num_nodes), jnp.float32)
    a = a.at[src, dst].add(edge_weight)
    a = a.at[dst, src].add(edge_weight)                 # symmetrize
    a = a + jnp.eye(num_nodes, dtype=jnp.float32)       # self loops
    deg = a.sum(axis=1)
    dinv = jnp.where(deg > 0, 1.0 / jnp.sqrt(deg), 0.0)
    return dinv[:, None] * a * dinv[None, :]


def _pad_axis(x, axis, mult):
    pad = (-x.shape[axis]) % mult
    if pad == 0:
        return x
    widths = [(0, 0)] * x.ndim
    widths[axis] = (0, pad)
    return jnp.pad(x, widths)


@functools.partial(jax.jit, static_argnames=("num_graphs",))
def marvel_encoder_forward(params, aug_keys, x, edge_index, batch, num_graphs):
    """Mirrors Encoder.forward: 2 augmented views + 3 encoder passes (fused)."""
    n, f_in = x.shape
    hid = params["w2"].shape[1]

    # --- augmentors (deterministic from the PRNG keys) ---
    ones_w = jnp.ones((edge_index.shape[1],), jnp.float32)
    keep_feat = (jax.random.uniform(aug_keys[0], (1, f_in)) >= 0.3).astype(x.dtype)
    x1 = x * keep_feat                                          # aug1: feature mask
    keep_edge = (jax.random.uniform(aug_keys[1], (edge_index.shape[1],)) >= 0.3)
    ew2 = keep_edge.astype(jnp.float32)                         # aug2: edge removing

    # --- two distinct normalized adjacencies (views 0 and 1 share adj0);
    #     node dim padded lane-dense (padded rows/cols are all-zero)        ---
    adj0 = build_norm_adj(edge_index, ones_w, n)
    adj2 = build_norm_adj(edge_index, ew2, n)
    adj_stack = jnp.stack([adj0, adj2]).astype(jnp.bfloat16)    # [2, N, N]
    adj_stack = _pad_axis(_pad_axis(adj_stack, 1, LANE), 2, LANE)
    adj_idx = jnp.array([0, 0, 1], dtype=jnp.int32)             # view -> adjacency

    # --- deduped node-feature views (views 0 and 2 share x), padded lane-dense
    x_stack = jnp.stack([x, x1]).astype(jnp.bfloat16)           # [2, N, F]
    x_stack = _pad_axis(_pad_axis(x_stack, 1, LANE), 2, LANE)
    x_idx = jnp.array([0, 1, 0], dtype=jnp.int32)               # view -> features

    # --- lane-dense (128-padded) parameters: bf16 weights, f32 biases ---
    w1 = _pad_axis(_pad_axis(params["w1"], 0, LANE), 1, LANE).astype(jnp.bfloat16)
    w2 = _pad_axis(_pad_axis(params["w2"], 0, LANE), 1, LANE).astype(jnp.bfloat16)
    b1 = _pad_axis(params["b1"], 1, LANE).astype(jnp.float32)
    b2 = _pad_axis(params["b2"], 1, LANE).astype(jnp.float32)

    # sum-pool readout matrix P[g, n] = 1 iff node n belongs to graph g
    pool = (batch[None, :] == jnp.arange(num_graphs)[:, None]).astype(jnp.bfloat16)
    pool = _pad_axis(pool, 1, LANE)

    z_stack, g_stack = gcn_encode_views(adj_idx, x_idx, adj_stack, x_stack,
                                        w1, b1, w2, b2, pool)
    z_stack = z_stack[:, :n, :hid]                              # drop padding
    g_stack = g_stack[..., :hid]
    z, z1, z2 = z_stack[0], z_stack[1], z_stack[2]
    g, g1, g2 = g_stack[0], g_stack[1], g_stack[2]
    return z, g, z1, z2, g1, g2


# ------------------------- pure-JAX reference (f32) ------------------------

def _ref_encode(adj, xv, params, pool_f32):
    h1 = jnp.maximum(adj @ xv @ params["w1"] + params["b1"], 0.0)
    z = adj @ h1 @ params["w2"] + params["b2"]
    return z, pool_f32 @ z


# --------------------------------- main -----------------------------------

if __name__ == "__main__":
    key = jax.random.PRNGKey(0)
    k_w1, k_w2, k_x, k_a1, k_a2 = jax.random.split(key, 5)

    # small synthetic graph batch: 2 graphs x 8 nodes each
    num_graphs = 2
    nodes_per_graph = 8
    N = num_graphs * nodes_per_graph
    F_IN = 8
    HID = 32

    # ring edges within each graph (directed COO; symmetrized in the glue)
    src, dst = [], []
    for gidx in range(num_graphs):
        base = gidx * nodes_per_graph
        for i in range(nodes_per_graph):
            src.append(base + i)
            dst.append(base + (i + 1) % nodes_per_graph)
    edge_index = jnp.array([src, dst], dtype=jnp.int32)            # [2, E]
    batch = jnp.repeat(jnp.arange(num_graphs, dtype=jnp.int32),
                       nodes_per_graph)                            # [N]

    x = jax.random.normal(k_x, (N, F_IN), dtype=jnp.float32)       # [N, F_in]

    params = {
        "w1": 0.1 * jax.random.normal(k_w1, (F_IN, HID), dtype=jnp.float32),
        "b1": jnp.zeros((1, HID), dtype=jnp.float32),
        "w2": 0.1 * jax.random.normal(k_w2, (HID, HID), dtype=jnp.float32),
        "b2": jnp.zeros((1, HID), dtype=jnp.float32),
    }

    outs = marvel_encoder_forward(params, (k_a1, k_a2),
                                  x, edge_index, batch, num_graphs)
    outs = jax.block_until_ready(outs)
    z, g, z1, z2, g1, g2 = outs

    # ---- shape / finiteness checks ----
    assert z.shape == (N, HID) and z1.shape == (N, HID) and z2.shape == (N, HID)
    assert g.shape == (num_graphs, HID) and g1.shape == g.shape and g2.shape == g.shape
    assert all(bool(jnp.all(jnp.isfinite(o))) for o in outs)

    # ---- numerical check against a pure-JAX f32 reference (bf16 tolerance) ----
    ones_w = jnp.ones((edge_index.shape[1],), jnp.float32)
    keep_feat = (jax.random.uniform(k_a1, (1, F_IN)) >= 0.3).astype(x.dtype)
    keep_edge = (jax.random.uniform(k_a2, (edge_index.shape[1],)) >= 0.3)
    adj0 = build_norm_adj(edge_index, ones_w, N)
    adj2 = build_norm_adj(edge_index, keep_edge.astype(jnp.float32), N)
    pool_f32 = (batch[None, :] == jnp.arange(num_graphs)[:, None]).astype(jnp.float32)

    z_r, g_r = _ref_encode(adj0, x, params, pool_f32)
    z1_r, g1_r = _ref_encode(adj0, x * keep_feat, params, pool_f32)
    z2_r, g2_r = _ref_encode(adj2, x, params, pool_f32)
    for got, ref in ((z, z_r), (g, g_r), (z1, z1_r), (g1, g1_r), (z2, z2_r), (g2, g2_r)):
        assert bool(jnp.allclose(got, ref, rtol=5e-2, atol=5e-2))

    print("KERNEL_OK")
</pallas_src>

<mosaic_0001>
module attributes {stable_mosaic.version = 11 : i64} {
  func.func @_gcn_views_kernel(%arg0: i32, %arg1: memref<3xi32, #tpu.memory_space<smem>>, %arg2: memref<3xi32, #tpu.memory_space<smem>>, %arg3: memref<1x128x128xbf16, #tpu.memory_space<vmem>>, %arg4: memref<1x128x128xbf16, #tpu.memory_space<vmem>>, %arg5: memref<128x128xbf16, #tpu.memory_space<vmem>>, %arg6: memref<1x128xf32, #tpu.memory_space<vmem>>, %arg7: memref<128x128xbf16, #tpu.memory_space<vmem>>, %arg8: memref<1x128xf32, #tpu.memory_space<vmem>>, %arg9: memref<2x128xbf16, #tpu.memory_space<vmem>>, %arg10: memref<1x128x128xf32, #tpu.memory_space<vmem>>, %arg11: memref<1x2x128xf32, #tpu.memory_space<vmem>>) attributes {dimension_semantics = [#tpu.dimension_semantics<parallel>], iteration_bounds = array<i64: 3>, scalar_prefetch = 2 : i64, scratch_operands = 0 : i64, tpu.core_type = #tpu.core_type<tc>, window_params = [{transform_indices = @transform_0, window_bounds = array<i64: 1, 128, 128>}, {transform_indices = @transform_1, window_bounds = array<i64: 1, 128, 128>}, {pipeline_mode = #tpu.pipeline_mode<synchronous>, transform_indices = @transform_2, window_bounds = array<i64: 128, 128>}, {pipeline_mode = #tpu.pipeline_mode<synchronous>, transform_indices = @transform_3, window_bounds = array<i64: 1, 128>}, {pipeline_mode = #tpu.pipeline_mode<synchronous>, transform_indices = @transform_4, window_bounds = array<i64: 128, 128>}, {pipeline_mode = #tpu.pipeline_mode<synchronous>, transform_indices = @transform_5, window_bounds = array<i64: 1, 128>}, {pipeline_mode = #tpu.pipeline_mode<synchronous>, transform_indices = @transform_6, window_bounds = array<i64: 2, 128>}, {transform_indices = @transform_7, window_bounds = array<i64: 1, 128, 128>}, {transform_indices = @transform_8, window_bounds = array<i64: 1, 2, 128>}]} {
    %c0 = arith.constant 0 : index
    %c0_0 = arith.constant 0 : index
    %c0_1 = arith.constant 0 : index
    %0 = vector.load %arg3[%c0, %c0_0, %c0_1] : memref<1x128x128xbf16, #tpu.memory_space<vmem>>, vector<1x128x128xbf16>
    %1 = vector.shape_cast %0 : vector<1x128x128xbf16> to vector<128x128xbf16>
    %c0_2 = arith.constant 0 : index
    %c0_3 = arith.constant 0 : index
    %c0_4 = arith.constant 0 : index
    %2 = vector.load %arg4[%c0_2, %c0_3, %c0_4] : memref<1x128x128xbf16, #tpu.memory_space<vmem>>, vector<1x128x128xbf16>
    %3 = vector.shape_cast %2 : vector<1x128x128xbf16> to vector<128x128xbf16>
    %c0_5 = arith.constant 0 : index
    %c0_6 = arith.constant 0 : index
    %4 = vector.load %arg5[%c0_5, %c0_6] : memref<128x128xbf16, #tpu.memory_space<vmem>>, vector<128x128xbf16>
    %cst = arith.constant dense<0.000000e+00> : vector<128x128xf32>
    %5 = tpu.matmul %3, %4, %cst {dimension_numbers = #tpu.dot_dimension_numbers<[1], [0], [0], [1], [0, 0, 1, 1], [], []>} : vector<128x128xbf16>, vector<128x128xbf16>, vector<128x128xf32> -> vector<128x128xf32>
    %6 = arith.truncf %5 : vector<128x128xf32> to vector<128x128xbf16>
    %cst_7 = arith.constant dense<0.000000e+00> : vector<128x128xf32>
    %7 = tpu.matmul %1, %6, %cst_7 {dimension_numbers = #tpu.dot_dimension_numbers<[1], [0], [0], [1], [0, 0, 1, 1], [], []>} : vector<128x128xbf16>, vector<128x128xbf16>, vector<128x128xf32> -> vector<128x128xf32>
    %c0_8 = arith.constant 0 : index
    %c0_9 = arith.constant 0 : index
    %8 = vector.load %arg6[%c0_8, %c0_9] : memref<1x128xf32, #tpu.memory_space<vmem>>, vector<1x128xf32>
    %9 = vector.broadcast %8 : vector<1x128xf32> to vector<128x128xf32>
    %10 = arith.addf %7, %9 : vector<128x128xf32>
    %cst_10 = arith.constant 0.000000e+00 : f32
    %11 = vector.broadcast %cst_10 : f32 to vector<128x128xf32>
    %12 = arith.maximumf %10, %11 : vector<128x128xf32>
    %13 = arith.truncf %12 : vector<128x128xf32> to vector<128x128xbf16>
    %c0_11 = arith.constant 0 : index
    %c0_12 = arith.constant 0 : index
    %14 = vector.load %arg7[%c0_11, %c0_12] : memref<128x128xbf16, #tpu.memory_space<vmem>>, vector<128x128xbf16>
    %cst_13 = arith.constant dense<0.000000e+00> : vector<128x128xf32>
    %15 = tpu.matmul %13, %14, %cst_13 {dimension_numbers = #tpu.dot_dimension_numbers<[1], [0], [0], [1], [0, 0, 1, 1], [], []>} : vector<128x128xbf16>, vector<128x128xbf16>, vector<128x128xf32> -> vector<128x128xf32>
    %16 = arith.truncf %15 : vector<128x128xf32> to vector<128x128xbf16>
    %cst_14 = arith.constant dense<0.000000e+00> : vector<128x128xf32>
    %17 = tpu.matmul %1, %16, %cst_14 {dimension_numbers = #tpu.dot_dimension_numbers<[1], [0], [0], [1], [0, 0, 1, 1], [], []>} : vector<128x128xbf16>, vector<128x128xbf16>, vector<128x128xf32> -> vector<128x128xf32>
    %c0_15 = arith.constant 0 : index
    %c0_16 = arith.constant 0 : index
    %18 = vector.load %arg8[%c0_15, %c0_16] : memref<1x128xf32, #tpu.memory_space<vmem>>, vector<1x128xf32>
    %19 = vector.broadcast %18 : vector<1x128xf32> to vector<128x128xf32>
    %20 = arith.addf %17, %19 : vector<128x128xf32>
    %c0_17 = arith.constant 0 : index
    %c0_18 = arith.constant 0 : index
    %c0_19 = arith.constant 0 : index
    %21 = vector.load %arg10[%c0_17, %c0_18, %c0_19] : memref<1x128x128xf32, #tpu.memory_space<vmem>>, vector<1x128x128xf32>
    %22 = vector.shape_cast %21 : vector<1x128x128xf32> to vector<128x128xf32>
    %23 = vector.shape_cast %20 : vector<128x128xf32> to vector<1x128x128xf32>
    tpu.vector_store %arg10[%c0_17, %c0_18, %c0_19], %23 {strides = array<i32>} : memref<1x128x128xf32, #tpu.memory_space<vmem>>, vector<1x128x128xf32>,
    %c0_20 = arith.constant 0 : index
    %c0_21 = arith.constant 0 : index
    %24 = vector.load %arg9[%c0_20, %c0_21] : memref<2x128xbf16, #tpu.memory_space<vmem>>, vector<2x128xbf16>
    %25 = arith.truncf %20 : vector<128x128xf32> to vector<128x128xbf16>
    %cst_22 = arith.constant dense<0.000000e+00> : vector<2x128xf32>
    %26 = tpu.matmul %24, %25, %cst_22 {dimension_numbers = #tpu.dot_dimension_numbers<[1], [0], [0], [1], [0, 0, 1, 1], [], []>} : vector<2x128xbf16>, vector<128x128xbf16>, vector<2x128xf32> -> vector<2x128xf32>
    %c0_23 = arith.constant 0 : index
    %c0_24 = arith.constant 0 : index
    %c0_25 = arith.constant 0 : index
    %27 = vector.load %arg11[%c0_23, %c0_24, %c0_25] : memref<1x2x128xf32, #tpu.memory_space<vmem>>, vector<1x2x128xf32>
    %28 = vector.shape_cast %27 : vector<1x2x128xf32> to vector<2x128xf32>
    %29 = vector.shape_cast %26 : vector<2x128xf32> to vector<1x2x128xf32>
    tpu.vector_store %arg11[%c0_23, %c0_24, %c0_25], %29 {strides = array<i32>} : memref<1x2x128xf32, #tpu.memory_space<vmem>>, vector<1x2x128xf32>,
    return
  }
  func.func @transform_0(%arg0: i32, %arg1: memref<3xi32, #tpu.memory_space<smem>>, %arg2: memref<3xi32, #tpu.memory_space<smem>>) -> (i32, i32, i32) {
    %0 = arith.index_cast %arg0 : i32 to index
    %1 = memref.load %arg1[%0] : memref<3xi32, #tpu.memory_space<smem>>
    %c0_i32 = arith.constant 0 : i32
    %c0_i32_0 = arith.constant 0 : i32
    %c0_i32_1 = arith.constant 0 : i32
    return %1, %c0_i32, %c0_i32_0 : i32, i32, i32
  }
  func.func @transform_1(%arg0: i32, %arg1: memref<3xi32, #tpu.memory_space<smem>>, %arg2: memref<3xi32, #tpu.memory_space<smem>>) -> (i32, i32, i32) {
    %0 = arith.index_cast %arg0 : i32 to index
    %1 = memref.load %arg2[%0] : memref<3xi32, #tpu.memory_space<smem>>
    %c0_i32 = arith.constant 0 : i32
    %c0_i32_0 = arith.constant 0 : i32
    %c0_i32_1 = arith.constant 0 : i32
    return %1, %c0_i32, %c0_i32_0 : i32, i32, i32
  }
  func.func @transform_2(%arg0: i32, %arg1: memref<3xi32, #tpu.memory_space<smem>>, %arg2: memref<3xi32, #tpu.memory_space<smem>>) -> (i32, i32) {
    %c0_i32 = arith.constant 0 : i32
    %c0_i32_0 = arith.constant 0 : i32
    %c0_i32_1 = arith.constant 0 : i32
    return %c0_i32, %c0_i32_0 : i32, i32
  }
  func.func @transform_3(%arg0: i32, %arg1: memref<3xi32, #tpu.memory_space<smem>>, %arg2: memref<3xi32, #tpu.memory_space<smem>>) -> (i32, i32) {
    %c0_i32 = arith.constant 0 : i32
    %c0_i32_0 = arith.constant 0 : i32
    %c0_i32_1 = arith.constant 0 : i32
    return %c0_i32, %c0_i32_0 : i32, i32
  }
  func.func @transform_4(%arg0: i32, %arg1: memref<3xi32, #tpu.memory_space<smem>>, %arg2: memref<3xi32, #tpu.memory_space<smem>>) -> (i32, i32) {
    %c0_i32 = arith.constant 0 : i32
    %c0_i32_0 = arith.constant 0 : i32
    %c0_i32_1 = arith.constant 0 : i32
    return %c0_i32, %c0_i32_0 : i32, i32
  }
  func.func @transform_5(%arg0: i32, %arg1: memref<3xi32, #tpu.memory_space<smem>>, %arg2: memref<3xi32, #tpu.memory_space<smem>>) -> (i32, i32) {
    %c0_i32 = arith.constant 0 : i32
    %c0_i32_0 = arith.constant 0 : i32
    %c0_i32_1 = arith.constant 0 : i32
    return %c0_i32, %c0_i32_0 : i32, i32
  }
  func.func @transform_6(%arg0: i32, %arg1: memref<3xi32, #tpu.memory_space<smem>>, %arg2: memref<3xi32, #tpu.memory_space<smem>>) -> (i32, i32) {
    %c0_i32 = arith.constant 0 : i32
    %c0_i32_0 = arith.constant 0 : i32
    %c0_i32_1 = arith.constant 0 : i32
    return %c0_i32, %c0_i32_0 : i32, i32
  }
  func.func @transform_7(%arg0: i32, %arg1: memref<3xi32, #tpu.memory_space<smem>>, %arg2: memref<3xi32, #tpu.memory_space<smem>>) -> (i32, i32, i32) {
    %c0_i32 = arith.constant 0 : i32
    %c0_i32_0 = arith.constant 0 : i32
    %c0_i32_1 = arith.constant 0 : i32
    return %arg0, %c0_i32, %c0_i32_0 : i32, i32, i32
  }
  func.func @transform_8(%arg0: i32, %arg1: memref<3xi32, #tpu.memory_space<smem>>, %arg2: memref<3xi32, #tpu.memory_space<smem>>) -> (i32, i32, i32) {
    %c0_i32 = arith.constant 0 : i32
    %c0_i32_0 = arith.constant 0 : i32
    %c0_i32_1 = arith.constant 0 : i32
    return %arg0, %c0_i32, %c0_i32_0 : i32, i32, i32
  }
}

</mosaic_0001>

<llo_original>
// kernel: marvel_encoder_forward.1
$region0: #{marvel_encoder_forward.1}
  #allocation0 [shape = 'u32[]', space=smem, size = 0x4, offset = 0x4, fixed_abs, tag = 'smem constant byte address 0x4 - core index']
  #allocation1 [shape = 'u32[72,128]{1,0:T(1,128)}', space=vmem, size = 0x9000, scoped, tag = 'internal scratch']
  #allocation2 [shape = 's32[1]{0}', space=sflag, size = 0x4, scoped, tag = 'scoped memory for marvel_encoder_forward.1']
  #allocation3 [shape = 'u8[512]{0}', space=smem, size = 0x200, scoped, tag = 'prefetched SMEM operand 0']
  #allocation4 [shape = 'u8[512]{0}', space=smem, size = 0x200, scoped, tag = 'prefetched SMEM operand 1']
  %s0 = inlined_call_operand.vmem [shape: s32[3], index: 0, kind: input, shape index: {}]
  %s1 = inlined_call_operand.vmem [shape: s32[3], index: 1, kind: input, shape index: {}]
  %s2 = inlined_call_operand.vmem [shape: bf16[2,128,128], index: 2, kind: input, shape index: {}]
  %s3 = inlined_call_operand.vmem [shape: bf16[2,128,128], index: 3, kind: input, shape index: {}]
  %s4 = inlined_call_operand.vmem [shape: bf16[128,128], index: 4, kind: input, shape index: {}]
  %s5 = inlined_call_operand.vmem [shape: f32[1,128], index: 5, kind: input, shape index: {}]
  %s6 = inlined_call_operand.vmem [shape: bf16[128,128], index: 6, kind: input, shape index: {}]
  %s7 = inlined_call_operand.vmem [shape: f32[1,128], index: 7, kind: input, shape index: {}]
  %s8 = inlined_call_operand.vmem [shape: bf16[2,128], index: 8, kind: input, shape index: {}]
  %s9 = inlined_call_operand.vmem [shape: f32[3,128,128], index: 9, kind: output, shape index: {0}]
  %s10 = inlined_call_operand.vmem [shape: f32[3,2,128], index: 10, kind: output, shape index: {1}]
  %11 = xla_tuple %s9, %s10
  %s12 = sld [smem:[#allocation0]]
  $region69: #{marvel_encoder_forward.1} parent=0
    _
  %s14 = ssub.s32 1, %s12
  %s15 = scalar_select 0, %s14, %s12
  %s17 = sshll.u32 %s0, 4
  %s18 = int_to_ptr.vmem [resolvable:$true] %s17
  %20 = dma.vmem_to_smem %s18, 16, [#allocation3], [#allocation2]
  %s22 = sshll.u32 %s1, 4
  %s23 = int_to_ptr.vmem [resolvable:$true] %s22
  %25 = dma.vmem_to_smem %s23, 16, [#allocation4], [#allocation2]
  %27 = dma.done [#allocation2], 32
  %28 = sfence
  loop: start=0, step=1, limit=5
  $region2: #{marvel_encoder_forward.1} parent=0 // loop_pre_header
    _
  $region3: #{marvel_encoder_forward.1} parent=0 // loop_header
    %s30 = sphi 0, %s34
    %p31 = scmp.ge.s32.totalorder %s30, 5
    %s42 = sphi 0, %s44
    %s45 = sphi 0, %s42
    %s46 = sphi 0, %s45
    %s62 = sphi 0, %s46
    %s70 = sphi 0, %s72
    %s73 = sphi 0, %s70
    %s74 = sphi 0, %s73
    %s90 = sphi 0, %s74
    %s94 = sphi 0, %s94
    %s96 = sphi 0, %s94
    %s97 = sphi 0, %s96
    %s111 = sphi 0, %s97
    %s115 = sphi 0, %s115
    %s117 = sphi 0, %s115
    %s118 = sphi 0, %s117
    %s132 = sphi 0, %s118
    %s136 = sphi 0, %s136
    %s138 = sphi 0, %s136
    %s139 = sphi 0, %s138
    %s153 = sphi 0, %s139
    %s157 = sphi 0, %s157
    %s159 = sphi 0, %s157
    %s160 = sphi 0, %s159
    %s174 = sphi 0, %s160
    %s178 = sphi 0, %s178
    %s180 = sphi 0, %s178
    %s181 = sphi 0, %s180
    %s195 = sphi 0, %s181
    %s201 = sphi 0, %s203
    %s204 = sphi 0, %s201
    %s205 = sphi 0, %s204
    %s221 = sphi 0, %s205
    %s227 = sphi 0, %s229
    %s230 = sphi 0, %s227
    %s231 = sphi 0, %s230
    %s247 = sphi 0, %s231
  $region4: #{marvel_encoder_forward.1} parent=0 // loop_header_branch
    %33 = sbr.rel (%p31) target = $region8
  $region5: #{marvel_encoder_forward.1} parent=0 // loop_body
    %s35 = ssub.s32 %s30, 1
    %s36 = ssub.s32 %s30, 2
    %s37 = sadd.s32 %s30, 1
    %s38 = sld [smem:[#allocation3 + %s30]]
    %s39 = sld [smem:[#allocation3 + %s37]]
    %s40 = ssub.s32 %s38, %s39
    %p41 = scmp.eq.s32.totalorder %s40, 0
    %s43 = sadd.s32 %s42, 1
    %s44 = scalar_select %p41, %s42, %s43
    %p47 = pneg %p41
    %p48 = scmp.eq.s32.totalorder %s30, 2
    %p49 = por %p47, %p48
    %p50 = scmp.ne.s32.totalorder %s42, %s45
    %p51 = scmp.eq.s32.totalorder %s30, 0
    %p52 = por %p50, %p51
    %p53 = scmp.ne.s32.totalorder %s42, %s45
    %p54 = scmp.eq.s32.totalorder %s35, 2
    %p55 = por %p53, %p54
    %p56 = scmp.ne.s32.totalorder %s45, %s46
    %p57 = scmp.eq.s32.totalorder %s35, 0
    %p58 = por %p56, %p57
    %p59 = scmp.ne.s32.totalorder %s45, %s46
    %p60 = scmp.eq.s32.totalorder %s36, 2
    %p61 = por %p59, %p60
    %p63 = scmp.ne.s32.totalorder %s46, %s62
    %p64 = scmp.eq.s32.totalorder %s36, 0
    %p65 = por %p63, %p64
    %s66 = sld [smem:[#allocation4 + %s30]]
    %s67 = sld [smem:[#allocation4 + %s37]]
    %s68 = ssub.s32 %s66, %s67
    %p69 = scmp.eq.s32.totalorder %s68, 0
    %s71 = sadd.s32 %s70, 1
    %s72 = scalar_select %p69, %s70, %s71
    %p75 = pneg %p69
    %p76 = scmp.eq.s32.totalorder %s30, 2
    %p77 = por %p75, %p76
    %p78 = scmp.ne.s32.totalorder %s70, %s73
    %p79 = scmp.eq.s32.totalorder %s30, 0
    %p80 = por %p78, %p79
    %p81 = scmp.ne.s32.totalorder %s70, %s73
    %p82 = scmp.eq.s32.totalorder %s35, 2
    %p83 = por %p81, %p82
    %p84 = scmp.ne.s32.totalorder %s73, %s74
    %p85 = scmp.eq.s32.totalorder %s35, 0
    %p86 = por %p84, %p85
    %p87 = scmp.ne.s32.totalorder %s73, %s74
    %p88 = scmp.eq.s32.totalorder %s36, 2
    %p89 = por %p87, %p88
    %p91 = scmp.ne.s32.totalorder %s74, %s90
    %p92 = scmp.eq.s32.totalorder %s36, 0
    %p93 = por %p91, %p92
    %s95 = sadd.s32 %s94, 1
    %p98 = scmp.eq.s32.totalorder %s30, 2
    %p99 = scmp.ne.s32.totalorder %s94, %s96
    %p100 = scmp.eq.s32.totalorder %s30, 0
    %p101 = por %p99, %p100
    %p102 = scmp.ne.s32.totalorder %s94, %s96
    %p103 = scmp.eq.s32.totalorder %s35, 2
    %p104 = por %p102, %p103
    %p105 = scmp.ne.s32.totalorder %s96, %s97
    %p106 = scmp.eq.s32.totalorder %s35, 0
    %p107 = por %p105, %p106
    %p108 = scmp.ne.s32.totalorder %s96, %s97
    %p109 = scmp.eq.s32.totalorder %s36, 2
    %p110 = por %p108, %p109
    %p112 = scmp.ne.s32.totalorder %s97, %s111
    %p113 = scmp.eq.s32.totalorder %s36, 0
    %p114 = por %p112, %p113
    %s116 = sadd.s32 %s115, 1
    %p119 = scmp.eq.s32.totalorder %s30, 2
    %p120 = scmp.ne.s32.totalorder %s115, %s117
    %p121 = scmp.eq.s32.totalorder %s30, 0
    %p122 = por %p120, %p121
    %p123 = scmp.ne.s32.totalorder %s115, %s117
    %p124 = scmp.eq.s32.totalorder %s35, 2
    %p125 = por %p123, %p124
    %p126 = scmp.ne.s32.totalorder %s117, %s118
    %p127 = scmp.eq.s32.totalorder %s35, 0
    %p128 = por %p126, %p127
    %p129 = scmp.ne.s32.totalorder %s117, %s118
    %p130 = scmp.eq.s32.totalorder %s36, 2
    %p131 = por %p129, %p130
    %p133 = scmp.ne.s32.totalorder %s118, %s132
    %p134 = scmp.eq.s32.totalorder %s36, 0
    %p135 = por %p133, %p134
    %s137 = sadd.s32 %s136, 1
    %p140 = scmp.eq.s32.totalorder %s30, 2
    %p141 = scmp.ne.s32.totalorder %s136, %s138
    %p142 = scmp.eq.s32.totalorder %s30, 0
    %p143 = por %p141, %p142
    %p144 = scmp.ne.s32.totalorder %s136, %s138
    %p145 = scmp.eq.s32.totalorder %s35, 2
    %p146 = por %p144, %p145
    %p147 = scmp.ne.s32.totalorder %s138, %s139
    %p148 = scmp.eq.s32.totalorder %s35, 0
    %p149 = por %p147, %p148
    %p150 = scmp.ne.s32.totalorder %s138, %s139
    %p151 = scmp.eq.s32.totalorder %s36, 2
    %p152 = por %p150, %p151
    %p154 = scmp.ne.s32.totalorder %s139, %s153
    %p155 = scmp.eq.s32.totalorder %s36, 0
    %p156 = por %p154, %p155
    %s158 = sadd.s32 %s157, 1
    %p161 = scmp.eq.s32.totalorder %s30, 2
    %p162 = scmp.ne.s32.totalorder %s157, %s159
    %p163 = scmp.eq.s32.totalorder %s30, 0
    %p164 = por %p162, %p163
    %p165 = scmp.ne.s32.totalorder %s157, %s159
    %p166 = scmp.eq.s32.totalorder %s35, 2
    %p167 = por %p165, %p166
    %p168 = scmp.ne.s32.totalorder %s159, %s160
    %p169 = scmp.eq.s32.totalorder %s35, 0
    %p170 = por %p168, %p169
    %p171 = scmp.ne.s32.totalorder %s159, %s160
    %p172 = scmp.eq.s32.totalorder %s36, 2
    %p173 = por %p171, %p172
    %p175 = scmp.ne.s32.totalorder %s160, %s174
    %p176 = scmp.eq.s32.totalorder %s36, 0
    %p177 = por %p175, %p176
    %s179 = sadd.s32 %s178, 1
    %p182 = scmp.eq.s32.totalorder %s30, 2
    %p183 = scmp.ne.s32.totalorder %s178, %s180
    %p184 = scmp.eq.s32.totalorder %s30, 0
    %p185 = por %p183, %p184
    %p186 = scmp.ne.s32.totalorder %s178, %s180
    %p187 = scmp.eq.s32.totalorder %s35, 2
    %p188 = por %p186, %p187
    %p189 = scmp.ne.s32.totalorder %s180, %s181
    %p190 = scmp.eq.s32.totalorder %s35, 0
    %p191 = por %p189, %p190
    %p192 = scmp.ne.s32.totalorder %s180, %s181
    %p193 = scmp.eq.s32.totalorder %s36, 2
    %p194 = por %p192, %p193
    %p196 = scmp.ne.s32.totalorder %s181, %s195
    %p197 = scmp.eq.s32.totalorder %s36, 0
    %p198 = por %p196, %p197
    %s199 = ssub.s32 %s30, %s37
    %p200 = scmp.eq.s32.totalorder %s199, 0
    %s202 = sadd.s32 %s201, 1
    %s203 = scalar_select %p200, %s201, %s202
    %p206 = pneg %p200
    %p207 = scmp.eq.s32.totalorder %s30, 2
    %p208 = por %p206, %p207
    %p209 = scmp.ne.s32.totalorder %s201, %s204
    %p210 = scmp.eq.s32.totalorder %s30, 0
    %p211 = por %p209, %p210
    %p212 = scmp.ne.s32.totalorder %s201, %s204
    %p213 = scmp.eq.s32.totalorder %s35, 2
    %p214 = por %p212, %p213
    %p215 = scmp.ne.s32.totalorder %s204, %s205
    %p216 = scmp.eq.s32.totalorder %s35, 0
    %p217 = por %p215, %p216
    %p218 = scmp.ne.s32.totalorder %s204, %s205
    %p219 = scmp.eq.s32.totalorder %s36, 2
    %p220 = por %p218, %p219
    %p222 = scmp.ne.s32.totalorder %s205, %s221
    %p223 = scmp.eq.s32.totalorder %s36, 0
    %p224 = por %p222, %p223
    %s225 = ssub.s32 %s30, %s37
    %p226 = scmp.eq.s32.totalorder %s225, 0
    %s228 = sadd.s32 %s227, 1
    %s229 = scalar_select %p226, %s227, %s228
    %p232 = pneg %p226
    %p233 = scmp.eq.s32.totalorder %s30, 2
    %p234 = por %p232, %p233
    %p235 = scmp.ne.s32.totalorder %s227, %s230
    %p236 = scmp.eq.s32.totalorder %s30, 0
    %p237 = por %p235, %p236
    %p238 = scmp.ne.s32.totalorder %s227, %s230
    %p239 = scmp.eq.s32.totalorder %s35, 2
    %p240 = por %p238, %p239
    %p241 = scmp.ne.s32.totalorder %s230, %s231
    %p242 = scmp.eq.s32.totalorder %s35, 0
    %p243 = por %p241, %p242
    %p244 = scmp.ne.s32.totalorder %s230, %s231
    %p245 = scmp.eq.s32.totalorder %s36, 2
    %p246 = por %p244, %p245
    %p248 = scmp.ne.s32.totalorder %s231, %s247
    %p249 = scmp.eq.s32.totalorder %s36, 0
    %p250 = por %p248, %p249
    %p251 = scmp.le.s32.totalorder 1, %s30
    %p252 = scmp.lt.s32.totalorder %s30, 4
    %p253 = pnand %p251, %p252
    %p254 = pneg %p253
    // Predicated region
    $region9: #{marvel_encoder_forward.1} parent=5 // pred_check
      _
    $region10: #{marvel_encoder_forward.1} parent=5 // pred_check_branch
      %256 = sbr.rel (%p253) target = $region12
    $region11: #{marvel_encoder_forward.1} parent=5 // pred_region
      %s257 = ssub.s32 %s30, 1
      // Predicated region
      $region13: #{marvel_encoder_forward.1} parent=11 // pred_check
        %p258 = pneg %p107
      $region14: #{marvel_encoder_forward.1} parent=11 // pred_check_branch
        %260 = sbr.rel (%p258) target = $region16
      $region15: #{marvel_encoder_forward.1} parent=11 // pred_region
        _
      $region16: #{marvel_encoder_forward.1} parent=11 // pred_fallthru
        _
      // Predicated region
      $region17: #{marvel_encoder_forward.1} parent=11 // pred_check
        %p261 = pneg %p128
      $region18: #{marvel_encoder_forward.1} parent=11 // pred_check_branch
        %263 = sbr.rel (%p261) target = $region20
      $region19: #{marvel_encoder_forward.1} parent=11 // pred_region
        _
      $region20: #{marvel_encoder_forward.1} parent=11 // pred_fallthru
        _
      // Predicated region
      $region21: #{marvel_encoder_forward.1} parent=11 // pred_check
        %p264 = pneg %p149
      $region22: #{marvel_encoder_forward.1} parent=11 // pred_check_branch
        %266 = sbr.rel (%p264) target = $region24
      $region23: #{marvel_encoder_forward.1} parent=11 // pred_region
        _
      $region24: #{marvel_encoder_forward.1} parent=11 // pred_fallthru
        _
      // Predicated region
      $region25: #{marvel_encoder_forward.1} parent=11 // pred_check
        %p267 = pneg %p170
      $region26: #{marvel_encoder_forward.1} parent=11 // pred_check_branch
        %269 = sbr.rel (%p267) target = $region28
      $region27: #{marvel_encoder_forward.1} parent=11 // pred_region
        _
      $region28: #{marvel_encoder_forward.1} parent=11 // pred_fallthru
        _
      // Predicated region
      $region29: #{marvel_encoder_forward.1} parent=11 // pred_check
        %p270 = pneg %p191
      $region30: #{marvel_encoder_forward.1} parent=11 // pred_check_branch
        %272 = sbr.rel (%p270) target = $region32
      $region31: #{marvel_encoder_forward.1} parent=11 // pred_region
        _
      $region32: #{marvel_encoder_forward.1} parent=11 // pred_fallthru
        _
    $region12: #{marvel_encoder_forward.1} parent=5 // pred_fallthru
      _
    %p273 = scmp.lt.s32.totalorder %s30, 3
    // Predicated region
    $region33: #{marvel_encoder_forward.1} parent=5 // pred_check
      %p274 = pneg %p273
    $region34: #{marvel_encoder_forward.1} parent=5 // pred_check_branch
      %276 = sbr.rel (%p274) target = $region36
    $region35: #{marvel_encoder_forward.1} parent=5 // pred_region
      // Predicated region
      $region37: #{marvel_encoder_forward.1} parent=35 // pred_check
        %p277 = pneg %p52
      $region38: #{marvel_encoder_forward.1} parent=35 // pred_check_branch
        %279 = sbr.rel (%p277) target = $region40
      $region39: #{marvel_encoder_forward.1} parent=35 // pred_region
        %s280 = sld [smem:[#allocation3 + %s30]]
        %p281 = scmp.lt.s32.totalorder %s280, 1
        %s282 = scalar_select %p281, %s280, 1
        %s283 = smul.addr %s282, 16
        %s284 = smul.addr %s283, 4
        %s285 = scalar_lea.vmem %s2, %s284
        %s286 = sld [smem:[#allocation3 + %s30]]
      $region40: #{marvel_encoder_forward.1} parent=35 // pred_fallthru
        _
      // Predicated region
      $region41: #{marvel_encoder_forward.1} parent=35 // pred_check
        %p287 = pneg %p80
      $region42: #{marvel_encoder_forward.1} parent=35 // pred_check_branch
        %289 = sbr.rel (%p287) target = $region44
      $region43: #{marvel_encoder_forward.1} parent=35 // pred_region
        %s290 = sld [smem:[#allocation4 + %s30]]
        %p291 = scmp.lt.s32.totalorder %s290, 1
        %s292 = scalar_select %p291, %s290, 1
        %s293 = smul.addr %s292, 16
        %s294 = smul.addr %s293, 4
        %s295 = scalar_lea.vmem %s3, %s294
        %s296 = sld [smem:[#allocation4 + %s30]]
      $region44: #{marvel_encoder_forward.1} parent=35 // pred_fallthru
        _
    $region36: #{marvel_encoder_forward.1} parent=5 // pred_fallthru
      _
    %p297 = scmp.le.s32.totalorder 1, %s30
    %p298 = scmp.lt.s32.totalorder %s30, 4
    %p299 = pnand %p297, %p298
    %p300 = pneg %p299
    // Predicated region
    $region45: #{marvel_encoder_forward.1} parent=5 // pred_check
      _
    $region46: #{marvel_encoder_forward.1} parent=5 // pred_check_branch
      %302 = sbr.rel (%p299) target = $region48
    $region47: #{marvel_encoder_forward.1} parent=5 // pred_region
      %s303 = ssub.s32 %s30, 1
      %s304 = sld [smem:[#allocation3 + %s35]]
      %p305 = scmp.lt.s32.totalorder %s304, 1
      %s306 = scalar_select %p305, %s304, 1
      %s307 = smul.addr %s306, 16
      %s308 = smul.addr %s307, 4
      %s309 = scalar_lea.vmem %s2, %s308
      %p310 = pneg %p58
      %p311 = pneg %p55
      %s312 = sld [smem:[#allocation4 + %s35]]
      %p313 = scmp.lt.s32.totalorder %s312, 1
      %s314 = scalar_select %p313, %s312, 1
      %s315 = smul.addr %s314, 16
      %s316 = smul.addr %s315, 4
      %s317 = scalar_lea.vmem %s3, %s316
      %p318 = pneg %p86
      %p319 = pneg %p83
      %p320 = pneg %p107
      %p321 = pneg %p104
      %p322 = pneg %p128
      %p323 = pneg %p125
      %p324 = pneg %p149
      %p325 = pneg %p146
      %p326 = pneg %p170
      %p327 = pneg %p167
      %p328 = pneg %p191
      %p329 = pneg %p188
      %p330 = pneg %p217
      %p331 = pneg %p214
      %p332 = scmp.lt.s32.totalorder %s35, 2
      %s333 = scalar_select %p332, %s35, 2
      %s334 = smul.addr %s333, 16
      %s335 = smul.addr %s334, 8
      %s336 = scalar_lea.vmem %s9, %s335
      %p337 = pneg %p243
      %p338 = pneg %p240
      %p339 = scmp.lt.s32.totalorder %s35, 2
      %s340 = scalar_select %p339, %s35, 2
      %s341 = smul.addr %s340, 2
      %s342 = scalar_lea.vmem %s10, %s341
      %s343 = sld [smem:[#allocation3 + %s35]]
      %p344 = scmp.lt.s32.totalorder %s343, 1
      %s345 = scalar_select %p344, %s343, 1
      %s346 = smul.addr %s345, 16
      %s347 = smul.addr %s346, 4
      %s348 = scalar_lea.vmem %s2, %s347
      %s349 = sld [smem:[#allocation3 + %s35]]
      %s350 = sld [smem:[#allocation4 + %s35]]
      %p351 = scmp.lt.s32.totalorder %s350, 1
      %s352 = scalar_select %p351, %s350, 1
      %s353 = smul.addr %s352, 16
      %s354 = smul.addr %s353, 4
      %s355 = scalar_lea.vmem %s3, %s354
      %s356 = sld [smem:[#allocation4 + %s35]]
      %p357 = scmp.lt.s32.totalorder %s35, 2
      %s358 = scalar_select %p357, %s35, 2
      %s359 = smul.addr %s358, 16
      %s360 = smul.addr %s359, 8
      %s361 = scalar_lea.vmem %s9, %s360
      %p362 = scmp.lt.s32.totalorder %s35, 2
      %s363 = scalar_select %p362, %s35, 2
      %s364 = smul.addr %s363, 2
      %s365 = scalar_lea.vmem %s10, %s364
      %v366 = vld [vmem:[%s348] sm:$0xf]
      %v367 = vld [vmem:[%s348 + $0x4] sm:$0xf]
      %v368 = vld [vmem:[%s348 + $0x8] sm:$0xf]
      %v369 = vld [vmem:[%s348 + $0xc] sm:$0xf]
      %v370 = vld [vmem:[%s348 + $0x10] sm:$0xf]
      %v371 = vld [vmem:[%s348 + $0x14] sm:$0xf]
      %v372 = vld [vmem:[%s348 + $0x18] sm:$0xf]
      %v373 = vld [vmem:[%s348 + $0x1c] sm:$0xf]
      %v374 = vld [vmem:[%s348 + $0x20] sm:$0xf]
      %v375 = vld [vmem:[%s348 + $0x24] sm:$0xf]
      %v376 = vld [vmem:[%s348 + $0x28] sm:$0xf]
      %v377 = vld [vmem:[%s348 + $0x2c] sm:$0xf]
      %v378 = vld [vmem:[%s348 + $0x30] sm:$0xf]
      %v379 = vld [vmem:[%s348 + $0x34] sm:$0xf]
      %v380 = vld [vmem:[%s348 + $0x38] sm:$0xf]
      %v381 = vld [vmem:[%s348 + $0x3c] sm:$0xf]
      %v382 = vld [vmem:[%s355] sm:$0xf]
      %v383 = vld [vmem:[%s355 + $0x4] sm:$0xf]
      %v384 = vld [vmem:[%s355 + $0x8] sm:$0xf]
      %v385 = vld [vmem:[%s355 + $0xc] sm:$0xf]
      %v386 = vld [vmem:[%s355 + $0x10] sm:$0xf]
      %v387 = vld [vmem:[%s355 + $0x14] sm:$0xf]
      %v388 = vld [vmem:[%s355 + $0x18] sm:$0xf]
      %v389 = vld [vmem:[%s355 + $0x1c] sm:$0xf]
      %v390 = vld [vmem:[%s355 + $0x20] sm:$0xf]
      %v391 = vld [vmem:[%s355 + $0x24] sm:$0xf]
      %v392 = vld [vmem:[%s355 + $0x28] sm:$0xf]
      %v393 = vld [vmem:[%s355 + $0x2c] sm:$0xf]
      %v394 = vld [vmem:[%s355 + $0x30] sm:$0xf]
      %v395 = vld [vmem:[%s355 + $0x34] sm:$0xf]
      %v396 = vld [vmem:[%s355 + $0x38] sm:$0xf]
      %v397 = vld [vmem:[%s355 + $0x3c] sm:$0xf]
      %v398 = vld [vmem:[%s4] sm:$0xf]
      %v399 = vld [vmem:[%s4 + $0x4] sm:$0xf]
      %v400 = vld [vmem:[%s4 + $0x8] sm:$0xf]
      %v401 = vld [vmem:[%s4 + $0xc] sm:$0xf]
      %v402 = vld [vmem:[%s4 + $0x10] sm:$0xf]
      %v403 = vld [vmem:[%s4 + $0x14] sm:$0xf]
      %v404 = vld [vmem:[%s4 + $0x18] sm:$0xf]
      %v405 = vld [vmem:[%s4 + $0x1c] sm:$0xf]
      %v406 = vld [vmem:[%s4 + $0x20] sm:$0xf]
      %v407 = vld [vmem:[%s4 + $0x24] sm:$0xf]
      %v408 = vld [vmem:[%s4 + $0x28] sm:$0xf]
      %v409 = vld [vmem:[%s4 + $0x2c] sm:$0xf]
      %v410 = vld [vmem:[%s4 + $0x30] sm:$0xf]
      %v411 = vld [vmem:[%s4 + $0x34] sm:$0xf]
      %v412 = vld [vmem:[%s4 + $0x38] sm:$0xf]
      %v413 = vld [vmem:[%s4 + $0x3c] sm:$0xf]
      %v430 = vunpack.c.l.b16 %v382
      %v431 = vunpack.c.l.b16 %v383
      %v432 = vunpack.c.l.b16 %v384
      %v433 = vunpack.c.l.b16 %v385
      %v434 = vunpack.c.l.b16 %v386
      %v435 = vunpack.c.l.b16 %v387
      %v436 = vunpack.c.l.b16 %v388
      %v437 = vunpack.c.l.b16 %v389
      %v438 = vunpack.c.l.b16 %v390
      %v439 = vunpack.c.l.b16 %v391
      %v440 = vunpack.c.l.b16 %v392
      %v441 = vunpack.c.l.b16 %v393
      %v442 = vunpack.c.l.b16 %v394
      %v443 = vunpack.c.l.b16 %v395
      %v444 = vunpack.c.l.b16 %v396
      %v445 = vunpack.c.l.b16 %v397
      %v446 = vpack.c.b16 %v431, %v430
      %v447 = vpack.c.b16 %v433, %v432
      %v448 = vpack.c.b16 %v435, %v434
      %v449 = vpack.c.b16 %v437, %v436
      %v450 = vpack.c.b16 %v439, %v438
      %v451 = vpack.c.b16 %v441, %v440
      %v452 = vpack.c.b16 %v443, %v442
      %v453 = vpack.c.b16 %v445, %v444
      %v478 = vunpack.c.l.b16 %v398
      %v479 = vunpack.c.l.b16 %v399
      %v480 = vunpack.c.l.b16 %v400
      %v481 = vunpack.c.l.b16 %v401
      %v482 = vunpack.c.l.b16 %v402
      %v483 = vunpack.c.l.b16 %v403
      %v484 = vunpack.c.l.b16 %v404
      %v485 = vunpack.c.l.b16 %v405
      %v486 = vunpack.c.l.b16 %v406
      %v487 = vunpack.c.l.b16 %v407
      %v488 = vunpack.c.l.b16 %v408
      %v489 = vunpack.c.l.b16 %v409
      %v490 = vunpack.c.l.b16 %v410
      %v491 = vunpack.c.l.b16 %v411
      %v492 = vunpack.c.l.b16 %v412
      %v493 = vunpack.c.l.b16 %v413
      %v494 = vpack.c.b16 %v479, %v478
      %v495 = vpack.c.b16 %v481, %v480
      %v496 = vpack.c.b16 %v483, %v482
      %v497 = vpack.c.b16 %v485, %v484
      %v498 = vpack.c.b16 %v487, %v486
      %v499 = vpack.c.b16 %v489, %v488
      %v500 = vpack.c.b16 %v491, %v490
      %v501 = vpack.c.b16 %v493, %v492
      %510 = vmatpush.bf16.msra.mxu0 %v501
      %511 = vmatpush.bf16.msra.mxu0 %v500
      %512 = vmatpush.bf16.msra.mxu0 %v499
      %513 = vmatpush.bf16.msra.mxu0 %v498
      %514 = vmatpush.bf16.msra.mxu0 %v497
      %515 = vmatpush.bf16.msra.mxu0 %v496
      %516 = vmatpush.bf16.msra.mxu0 %v495
      %517 = vmatpush.bf16.msra.mxu0 %v494
      %518 = vmatmul.bf16.gmra.mxu0 %v446
      %v519 = vpop.f32.mrf.mxu0
      %v520 = vadd.f32 0.0, %v519
      %v521 = vpop.f32.mrf.mxu0
      %v522 = vadd.f32 0.0, %v521
      %523 = vmatmul.bf16.gmra.mxu0 %v447
      %v524 = vpop.f32.mrf.mxu0
      %v525 = vadd.f32 0.0, %v524
      %v526 = vpop.f32.mrf.mxu0
      %v527 = vadd.f32 0.0, %v526
      %528 = vmatmul.bf16.gmra.mxu0 %v448
      %v529 = vpop.f32.mrf.mxu0
      %v530 = vadd.f32 0.0, %v529
      %v531 = vpop.f32.mrf.mxu0
      %v532 = vadd.f32 0.0, %v531
      %533 = vmatmul.bf16.gmra.mxu0 %v449
      %v534 = vpop.f32.mrf.mxu0
      %v535 = vadd.f32 0.0, %v534
      %v536 = vpop.f32.mrf.mxu0
      %v537 = vadd.f32 0.0, %v536
      %538 = vmatmul.bf16.gmra.mxu0 %v450
      %v539 = vpop.f32.mrf.mxu0
      %v540 = vadd.f32 0.0, %v539
      %v541 = vpop.f32.mrf.mxu0
      %v542 = vadd.f32 0.0, %v541
      %543 = vmatmul.bf16.gmra.mxu0 %v451
      %v544 = vpop.f32.mrf.mxu0
      %v545 = vadd.f32 0.0, %v544
      %v546 = vpop.f32.mrf.mxu0
      %v547 = vadd.f32 0.0, %v546
      %548 = vmatmul.bf16.gmra.mxu0 %v452
      %v549 = vpop.f32.mrf.mxu0
      %v550 = vadd.f32 0.0, %v549
      %v551 = vpop.f32.mrf.mxu0
      %v552 = vadd.f32 0.0, %v551
      %553 = vmatmul.bf16.gmra.mxu0 %v453
      %v554 = vpop.f32.mrf.mxu0
      %v555 = vadd.f32 0.0, %v554
      %v556 = vpop.f32.mrf.mxu0
      %v557 = vadd.f32 0.0, %v556
      %558 = vdwg.mxu0
      %v559 = vpack.c.bf16 %v522, %v520
      %v560 = vpack.c.bf16 %v527, %v525
      %v561 = vpack.c.bf16 %v532, %v530
      %v562 = vpack.c.bf16 %v537, %v535
      %v563 = vpack.c.bf16 %v542, %v540
      %v564 = vpack.c.bf16 %v547, %v545
      %v565 = vpack.c.bf16 %v552, %v550
      %v566 = vpack.c.bf16 %v557, %v555
      %v567 = vld [vmem:[%s5] sm:$0x1]
      %v569 = vperm.slane %v567, 0
      %v587 = vunpack.c.l.b16 %v366
      %v588 = vunpack.c.l.b16 %v367
      %v589 = vunpack.c.l.b16 %v368
      %v590 = vunpack.c.l.b16 %v369
      %v591 = vunpack.c.l.b16 %v370
      %v592 = vunpack.c.l.b16 %v371
      %v593 = vunpack.c.l.b16 %v372
      %v594 = vunpack.c.l.b16 %v373
      %v595 = vunpack.c.l.b16 %v374
      %v596 = vunpack.c.l.b16 %v375
      %v597 = vunpack.c.l.b16 %v376
      %v598 = vunpack.c.l.b16 %v377
      %v599 = vunpack.c.l.b16 %v378
      %v600 = vunpack.c.l.b16 %v379
      %v601 = vunpack.c.l.b16 %v380
      %v602 = vunpack.c.l.b16 %v381
      %v603 = vpack.c.b16 %v588, %v587
      %v604 = vpack.c.b16 %v590, %v589
      %v605 = vpack.c.b16 %v592, %v591
      %v606 = vpack.c.b16 %v594, %v593
      %v607 = vpack.c.b16 %v596, %v595
      %v608 = vpack.c.b16 %v598, %v597
      %v609 = vpack.c.b16 %v600, %v599
      %v610 = vpack.c.b16 %v602, %v601
      %619 = vmatpush.bf16.msra.mxu0 %v566
      %620 = vmatpush.bf16.msra.mxu0 %v565
      %621 = vmatpush.bf16.msra.mxu0 %v564
      %622 = vmatpush.bf16.msra.mxu0 %v563
      %623 = vmatpush.bf16.msra.mxu0 %v562
      %624 = vmatpush.bf16.msra.mxu0 %v561
      %625 = vmatpush.bf16.msra.mxu0 %v560
      %626 = vmatpush.bf16.msra.mxu0 %v559
      %627 = vmatmul.bf16.gmra.mxu0 %v603
      %v628 = vpop.f32.mrf.mxu0
      %v629 = vadd.f32 %v569, %v628
      %v630 = vpop.f32.mrf.mxu0
      %v631 = vadd.f32 %v569, %v630
      %632 = vmatmul.bf16.gmra.mxu0 %v604
      %v633 = vpop.f32.mrf.mxu0
      %v634 = vadd.f32 %v569, %v633
      %v635 = vpop.f32.mrf.mxu0
      %v636 = vadd.f32 %v569, %v635
      %637 = vmatmul.bf16.gmra.mxu0 %v605
      %v638 = vpop.f32.mrf.mxu0
      %v639 = vadd.f32 %v569, %v638
      %v640 = vpop.f32.mrf.mxu0
      %v641 = vadd.f32 %v569, %v640
      %642 = vmatmul.bf16.gmra.mxu0 %v606
      %v643 = vpop.f32.mrf.mxu0
      %v644 = vadd.f32 %v569, %v643
      %v645 = vpop.f32.mrf.mxu0
      %v646 = vadd.f32 %v569, %v645
      %647 = vmatmul.bf16.gmra.mxu0 %v607
      %v648 = vpop.f32.mrf.mxu0
      %v649 = vadd.f32 %v569, %v648
      %v650 = vpop.f32.mrf.mxu0
      %v651 = vadd.f32 %v569, %v650
      %652 = vmatmul.bf16.gmra.mxu0 %v608
      %v653 = vpop.f32.mrf.mxu0
      %v654 = vadd.f32 %v569, %v653
      %v655 = vpop.f32.mrf.mxu0
      %v656 = vadd.f32 %v569, %v655
      %657 = vmatmul.bf16.gmra.mxu0 %v609
      %v658 = vpop.f32.mrf.mxu0
      %v659 = vadd.f32 %v569, %v658
      %v660 = vpop.f32.mrf.mxu0
      %v661 = vadd.f32 %v569, %v660
      %662 = vmatmul.bf16.gmra.mxu0 %v610
      %v663 = vpop.f32.mrf.mxu0
      %v664 = vadd.f32 %v569, %v663
      %v665 = vpop.f32.mrf.mxu0
      %v666 = vadd.f32 %v569, %v665
      %667 = vdwg.mxu0
      %v668 = vmax.f32 %v629, 0.0
      %v669 = vmax.f32 %v631, 0.0
      %v670 = vmax.f32 %v634, 0.0
      %v671 = vmax.f32 %v636, 0.0
      %v672 = vmax.f32 %v639, 0.0
      %v673 = vmax.f32 %v641, 0.0
      %v674 = vmax.f32 %v644, 0.0
      %v675 = vmax.f32 %v646, 0.0
      %v676 = vmax.f32 %v649, 0.0
      %v677 = vmax.f32 %v651, 0.0
      %v678 = vmax.f32 %v654, 0.0
      %v679 = vmax.f32 %v656, 0.0
      %v680 = vmax.f32 %v659, 0.0
      %v681 = vmax.f32 %v661, 0.0
      %v682 = vmax.f32 %v664, 0.0
      %v683 = vmax.f32 %v666, 0.0
      %v684 = vpack.c.bf16 %v669, %v668
      %v685 = vpack.c.bf16 %v671, %v670
      %v686 = vpack.c.bf16 %v673, %v672
      %v687 = vpack.c.bf16 %v675, %v674
      %v688 = vpack.c.bf16 %v677, %v676
      %v689 = vpack.c.bf16 %v679, %v678
      %v690 = vpack.c.bf16 %v681, %v680
      %v691 = vpack.c.bf16 %v683, %v682
      %v692 = vld [vmem:[%s6] sm:$0xf]
      %v693 = vld [vmem:[%s6 + $0x4] sm:$0xf]
      %v694 = vld [vmem:[%s6 + $0x8] sm:$0xf]
      %v695 = vld [vmem:[%s6 + $0xc] sm:$0xf]
      %v696 = vld [vmem:[%s6 + $0x10] sm:$0xf]
      %v697 = vld [vmem:[%s6 + $0x14] sm:$0xf]
      %v698 = vld [vmem:[%s6 + $0x18] sm:$0xf]
      %v699 = vld [vmem:[%s6 + $0x1c] sm:$0xf]
      %v700 = vld [vmem:[%s6 + $0x20] sm:$0xf]
      %v701 = vld [vmem:[%s6 + $0x24] sm:$0xf]
      %v702 = vld [vmem:[%s6 + $0x28] sm:$0xf]
      %v703 = vld [vmem:[%s6 + $0x2c] sm:$0xf]
      %v704 = vld [vmem:[%s6 + $0x30] sm:$0xf]
      %v705 = vld [vmem:[%s6 + $0x34] sm:$0xf]
      %v706 = vld [vmem:[%s6 + $0x38] sm:$0xf]
      %v707 = vld [vmem:[%s6 + $0x3c] sm:$0xf]
      %v724 = vunpack.c.l.b16 %v692
      %v725 = vunpack.c.l.b16 %v693
      %v726 = vunpack.c.l.b16 %v694
      %v727 = vunpack.c.l.b16 %v695
      %v728 = vunpack.c.l.b16 %v696
      %v729 = vunpack.c.l.b16 %v697
      %v730 = vunpack.c.l.b16 %v698
      %v731 = vunpack.c.l.b16 %v699
      %v732 = vunpack.c.l.b16 %v700
      %v733 = vunpack.c.l.b16 %v701
      %v734 = vunpack.c.l.b16 %v702
      %v735 = vunpack.c.l.b16 %v703
      %v736 = vunpack.c.l.b16 %v704
      %v737 = vunpack.c.l.b16 %v705
      %v738 = vunpack.c.l.b16 %v706
      %v739 = vunpack.c.l.b16 %v707
      %v740 = vpack.c.b16 %v725, %v724
      %v741 = vpack.c.b16 %v727, %v726
      %v742 = vpack.c.b16 %v729, %v728
      %v743 = vpack.c.b16 %v731, %v730
      %v744 = vpack.c.b16 %v733, %v732
      %v745 = vpack.c.b16 %v735, %v734
      %v746 = vpack.c.b16 %v737, %v736
      %v747 = vpack.c.b16 %v739, %v738
      %756 = vmatpush.bf16.msra.mxu0 %v747
      %757 = vmatpush.bf16.msra.mxu0 %v746
      %758 = vmatpush.bf16.msra.mxu0 %v745
      %759 = vmatpush.bf16.msra.mxu0 %v744
      %760 = vmatpush.bf16.msra.mxu0 %v743
      %761 = vmatpush.bf16.msra.mxu0 %v742
      %762 = vmatpush.bf16.msra.mxu0 %v741
      %763 = vmatpush.bf16.msra.mxu0 %v740
      %764 = vmatmul.bf16.gmra.mxu0 %v684
      %v765 = vpop.f32.mrf.mxu0
      %v766 = vadd.f32 0.0, %v765
      %v767 = vpop.f32.mrf.mxu0
      %v768 = vadd.f32 0.0, %v767
      %769 = vmatmul.bf16.gmra.mxu0 %v685
      %v770 = vpop.f32.mrf.mxu0
      %v771 = vadd.f32 0.0, %v770
      %v772 = vpop.f32.mrf.mxu0
      %v773 = vadd.f32 0.0, %v772
      %774 = vmatmul.bf16.gmra.mxu0 %v686
      %v775 = vpop.f32.mrf.mxu0
      %v776 = vadd.f32 0.0, %v775
      %v777 = vpop.f32.mrf.mxu0
      %v778 = vadd.f32 0.0, %v777
      %779 = vmatmul.bf16.gmra.mxu0 %v687
      %v780 = vpop.f32.mrf.mxu0
      %v781 = vadd.f32 0.0, %v780
      %v782 = vpop.f32.mrf.mxu0
      %v783 = vadd.f32 0.0, %v782
      %784 = vmatmul.bf16.gmra.mxu0 %v688
      %v785 = vpop.f32.mrf.mxu0
      %v786 = vadd.f32 0.0, %v785
      %v787 = vpop.f32.mrf.mxu0
      %v788 = vadd.f32 0.0, %v787
      %789 = vmatmul.bf16.gmra.mxu0 %v689
      %v790 = vpop.f32.mrf.mxu0
      %v791 = vadd.f32 0.0, %v790
      %v792 = vpop.f32.mrf.mxu0
      %v793 = vadd.f32 0.0, %v792
      %794 = vmatmul.bf16.gmra.mxu0 %v690
      %v795 = vpop.f32.mrf.mxu0
      %v796 = vadd.f32 0.0, %v795
      %v797 = vpop.f32.mrf.mxu0
      %v798 = vadd.f32 0.0, %v797
      %799 = vmatmul.bf16.gmra.mxu0 %v691
      %v800 = vpop.f32.mrf.mxu0
      %v801 = vadd.f32 0.0, %v800
      %v802 = vpop.f32.mrf.mxu0
      %v803 = vadd.f32 0.0, %v802
      %804 = vdwg.mxu0
      %v805 = vpack.c.bf16 %v768, %v766
      %v806 = vpack.c.bf16 %v773, %v771
      %v807 = vpack.c.bf16 %v778, %v776
      %v808 = vpack.c.bf16 %v783, %v781
      %v809 = vpack.c.bf16 %v788, %v786
      %v810 = vpack.c.bf16 %v793, %v791
      %v811 = vpack.c.bf16 %v798, %v796
      %v812 = vpack.c.bf16 %v803, %v801
      %v813 = vld [vmem:[%s7] sm:$0x1]
      %v815 = vperm.slane %v813, 0
      %817 = vmatpush.bf16.msra.mxu0 %v812
      %818 = vmatpush.bf16.msra.mxu0 %v811
      %819 = vmatpush.bf16.msra.mxu0 %v810
      %820 = vmatpush.bf16.msra.mxu0 %v809
      %821 = vmatpush.bf16.msra.mxu0 %v808
      %822 = vmatpush.bf16.msra.mxu0 %v807
      %823 = vmatpush.bf16.msra.mxu0 %v806
      %824 = vmatpush.bf16.msra.mxu0 %v805
      %825 = vmatmul.bf16.gmra.mxu0 %v603
      %v826 = vpop.f32.mrf.mxu0
      %v827 = vadd.f32 %v815, %v826
      %v828 = vpop.f32.mrf.mxu0
      %v829 = vadd.f32 %v815, %v828
      %830 = vmatmul.bf16.gmra.mxu0 %v604
      %v831 = vpop.f32.mrf.mxu0
      %v832 = vadd.f32 %v815, %v831
      %v833 = vpop.f32.mrf.mxu0
      %v834 = vadd.f32 %v815, %v833
      %835 = vmatmul.bf16.gmra.mxu0 %v605
      %v836 = vpop.f32.mrf.mxu0
      %v837 = vadd.f32 %v815, %v836
      %v838 = vpop.f32.mrf.mxu0
      %v839 = vadd.f32 %v815, %v838
      %840 = vmatmul.bf16.gmra.mxu0 %v606
      %v841 = vpop.f32.mrf.mxu0
      %v842 = vadd.f32 %v815, %v841
      %v843 = vpop.f32.mrf.mxu0
      %v844 = vadd.f32 %v815, %v843
      %845 = vmatmul.bf16.gmra.mxu0 %v607
      %v846 = vpop.f32.mrf.mxu0
      %v847 = vadd.f32 %v815, %v846
      %v848 = vpop.f32.mrf.mxu0
      %v849 = vadd.f32 %v815, %v848
      %850 = vmatmul.bf16.gmra.mxu0 %v608
      %v851 = vpop.f32.mrf.mxu0
      %v852 = vadd.f32 %v815, %v851
      %v853 = vpop.f32.mrf.mxu0
      %v854 = vadd.f32 %v815, %v853
      %855 = vmatmul.bf16.gmra.mxu0 %v609
      %v856 = vpop.f32.mrf.mxu0
      %v857 = vadd.f32 %v815, %v856
      %v858 = vpop.f32.mrf.mxu0
      %v859 = vadd.f32 %v815, %v858
      %860 = vmatmul.bf16.gmra.mxu0 %v610
      %v861 = vpop.f32.mrf.mxu0
      %v862 = vadd.f32 %v815, %v861
      %v863 = vpop.f32.mrf.mxu0
      %v864 = vadd.f32 %v815, %v863
      %865 = vdwg.mxu0
      %866 = vst [vmem:[%s361] sm:$0xff] %v827
      %867 = vst [vmem:[%s361 + $0x8] sm:$0xff] %v829
      %868 = vst [vmem:[%s361 + $0x10] sm:$0xff] %v832
      %869 = vst [vmem:[%s361 + $0x18] sm:$0xff] %v834
      %870 = vst [vmem:[%s361 + $0x20] sm:$0xff] %v837
      %871 = vst [vmem:[%s361 + $0x28] sm:$0xff] %v839
      %872 = vst [vmem:[%s361 + $0x30] sm:$0xff] %v842
      %873 = vst [vmem:[%s361 + $0x38] sm:$0xff] %v844
      %874 = vst [vmem:[%s361 + $0x40] sm:$0xff] %v847
      %875 = vst [vmem:[%s361 + $0x48] sm:$0xff] %v849
      %876 = vst [vmem:[%s361 + $0x50] sm:$0xff] %v852
      %877 = vst [vmem:[%s361 + $0x58] sm:$0xff] %v854
      %878 = vst [vmem:[%s361 + $0x60] sm:$0xff] %v857
      %879 = vst [vmem:[%s361 + $0x68] sm:$0xff] %v859
      %880 = vst [vmem:[%s361 + $0x70] sm:$0xff] %v862
      %881 = vst [vmem:[%s361 + $0x78] sm:$0xff] %v864
      %v882 = vld [vmem:[%s8] sm:$0x1]
      %v883 = vpack.c.bf16 %v829, %v827
      %v884 = vpack.c.bf16 %v834, %v832
      %v885 = vpack.c.bf16 %v839, %v837
      %v886 = vpack.c.bf16 %v844, %v842
      %v887 = vpack.c.bf16 %v849, %v847
      %v888 = vpack.c.bf16 %v854, %v852
      %v889 = vpack.c.bf16 %v859, %v857
      %v890 = vpack.c.bf16 %v864, %v862
      %891 = vmatpush.bf16.msra.mxu0 %v890
      %892 = vmatpush.bf16.msra.mxu0 %v889
      %893 = vmatpush.bf16.msra.mxu0 %v888
      %894 = vmatpush.bf16.msra.mxu0 %v887
      %895 = vmatpush.bf16.msra.mxu0 %v886
      %896 = vmatpush.bf16.msra.mxu0 %v885
      %897 = vmatpush.bf16.msra.mxu0 %v884
      %898 = vmatpush.bf16.msra.mxu0 %v883
      %899 = vmatmul.bf16.gmra.mxu0 %v882
      %v900 = vpop.f32.mrf.mxu0
      %v901 = vadd.f32 0.0, %v900
      %v902 = vpop.f32.mrf.mxu0
      %903 = vdwg.mxu0
      %904 = vst [vmem:[%s365] sm:$0x3] %v901
      %p905 = scmp.lt.s32.totalorder %s35, 2
      %s906 = scalar_select %p905, %s35, 2
      %s907 = smul.addr %s906, 16
      %s908 = smul.addr %s907, 8
      %s909 = scalar_lea.vmem %s9, %s908
      %p910 = scmp.lt.s32.totalorder %s35, 2
      %s911 = scalar_select %p910, %s35, 2
      %s912 = smul.addr %s911, 2
      %s913 = scalar_lea.vmem %s10, %s912
      // Predicated region
      $region49: #{marvel_encoder_forward.1} parent=47 // pred_check
        %p914 = pneg %p214
      $region50: #{marvel_encoder_forward.1} parent=47 // pred_check_branch
        %916 = sbr.rel (%p914) target = $region52
      $region51: #{marvel_encoder_forward.1} parent=47 // pred_region
        _
      $region52: #{marvel_encoder_forward.1} parent=47 // pred_fallthru
        _
      // Predicated region
      $region53: #{marvel_encoder_forward.1} parent=47 // pred_check
        %p917 = pneg %p240
      $region54: #{marvel_encoder_forward.1} parent=47 // pred_check_branch
        %919 = sbr.rel (%p917) target = $region56
      $region55: #{marvel_encoder_forward.1} parent=47 // pred_region
        _
      $region56: #{marvel_encoder_forward.1} parent=47 // pred_fallthru
        _
    $region48: #{marvel_encoder_forward.1} parent=5 // pred_fallthru
      _
    %p920 = scmp.le.s32.totalorder 2, %s30
    // Predicated region
    $region57: #{marvel_encoder_forward.1} parent=5 // pred_check
      %p921 = pneg %p920
    $region58: #{marvel_encoder_forward.1} parent=5 // pred_check_branch
      %923 = sbr.rel (%p921) target = $region60
    $region59: #{marvel_encoder_forward.1} parent=5 // pred_region
      %s924 = ssub.s32 %s30, 2
      // Predicated region
      $region61: #{marvel_encoder_forward.1} parent=59 // pred_check
        %p925 = pneg %p220
      $region62: #{marvel_encoder_forward.1} parent=59 // pred_check_branch
        %927 = sbr.rel (%p925) target = $region64
      $region63: #{marvel_encoder_forward.1} parent=59 // pred_region
        %p928 = scmp.lt.s32.totalorder %s36, 2
        %s929 = scalar_select %p928, %s36, 2
        %s930 = smul.addr %s929, 16
        %s931 = smul.addr %s930, 8
        %s932 = scalar_lea.vmem %s9, %s931
      $region64: #{marvel_encoder_forward.1} parent=59 // pred_fallthru
        _
      // Predicated region
      $region65: #{marvel_encoder_forward.1} parent=59 // pred_check
        %p933 = pneg %p246
      $region66: #{marvel_encoder_forward.1} parent=59 // pred_check_branch
        %935 = sbr.rel (%p933) target = $region68
      $region67: #{marvel_encoder_forward.1} parent=59 // pred_region
        %p936 = scmp.lt.s32.totalorder %s36, 2
        %s937 = scalar_select %p936, %s36, 2
        %s938 = smul.addr %s937, 2
        %s939 = scalar_lea.vmem %s10, %s938
      $region68: #{marvel_encoder_forward.1} parent=59 // pred_fallthru
        _
    $region60: #{marvel_encoder_forward.1} parent=5 // pred_fallthru
      _
  $region6: #{marvel_encoder_forward.1} parent=0 // loop_footer
    %s34 = sadd.s32 1, %s30
  $region7: #{marvel_encoder_forward.1} parent=0 // loop_footer_branch
    %29 = sbr.rel target = $region3
  $region8: #{marvel_encoder_forward.1} parent=0 // loop_exit
    _

</llo_original>
